<compile_context>
chip_gen: v7x
topology: tpu7x:2x2x1
jax: 0.10.0
libtpu: 0.0.40
codegen_flags: <defaults>
</compile_context>

<pallas_src>
import jax
import jax.numpy as jnp
from jax.experimental import pallas as pl
from jax.experimental.pallas import tpu as pltpu

HIDDEN = 32
PACK = 8  # rows packed per super-row; in_size=16 -> 128-lane-dense x tiles


def _round_up(x, m):
    return ((x + m - 1) // m) * m


def _mlp_packed_kernel(xp_ref, w1p_ref, b1p_ref, w2p_ref, b2p_ref, op_ref):
    # xp_ref : (TMp, PACK*in)       f32  VMEM (cast to bf16 in-regs, no extra HBM pass)
    # w1p_ref: (PACK*in, PACK*32)   bf16 VMEM (block-diagonal, grid-resident)
    # b1p_ref: (1, PACK*32)         f32  VMEM
    # w2p_ref: (PACK*32, PACK*out)  bf16 VMEM (block-diagonal, grid-resident)
    # b2p_ref: (1, PACK*out)        f32  VMEM
    # op_ref : (TMp, PACK*out)      f32  VMEM
    x = xp_ref[...].astype(jnp.bfloat16)
    h = jnp.dot(x, w1p_ref[...], preferred_element_type=jnp.float32)
    h = jnp.maximum(h + b1p_ref[...], 0.0)          # lane-dense (TMp, 256) f32
    y = jnp.dot(h.astype(jnp.bfloat16), w2p_ref[...],
                preferred_element_type=jnp.float32)
    op_ref[...] = (y + b2p_ref[...]).astype(op_ref.dtype)


def neuralnet_forward(x, w1, b1, w2, b2, *,
                      block_rows=8192,        # original rows per grid step (sweepable)
                      min_pallas_rows=512):
    """Pallas forward pass: (N, in_size) -> (N, out_size)."""
    N, in_size = x.shape
    out_size = w2.shape[1]

    # Fast path: for tiny batches plain XLA fusion beats pallas_call overhead.
    if N < min_pallas_rows:
        return (jnp.maximum(x @ w1 + b1, 0.0) @ w2 + b2).astype(x.dtype)

    P = PACK
    pad = (-N) % P
    x_pal = jnp.pad(x, ((0, pad), (0, 0))) if pad else x
    n_packed = x_pal.shape[0] // P
    pin, ph, pout = P * in_size, P * HIDDEN, P * out_size

    # Free contiguous reshape: row r of xp holds original rows 8r .. 8r+7.
    xp = x_pal.reshape(n_packed, pin)

    # Block-diagonal packed weights (tiny, one-time): kron(I_P, w) places w on
    # the diagonal so xp @ w1p computes 8 independent row-matmuls per super-row.
    eye = jnp.eye(P, dtype=jnp.float32)
    w1p = jnp.kron(eye, w1.astype(jnp.float32)).astype(jnp.bfloat16)
    w2p = jnp.kron(eye, w2.astype(jnp.float32)).astype(jnp.bfloat16)
    b1p = jnp.tile(b1.astype(jnp.float32), P).reshape(1, ph)
    b2p = jnp.tile(b2.astype(jnp.float32), P).reshape(1, pout)

    # Packed-row tile: big enough to amortize the ~0.35us per-step overhead,
    # capped so the grid keeps >= 2 steps (v7x megacore), multiple of 8 sublanes.
    tile_p = min(block_rows // P, n_packed)
    if n_packed >= 16:
        tile_p = min(tile_p, pl.cdiv(n_packed, 2))
    tile_p = max(8, _round_up(tile_p, 8))
    grid = (pl.cdiv(n_packed, tile_p),)

    # Actual kernel work/traffic (weights are grid-resident, counted once).
    flops = 2 * n_packed * (pin * ph + ph * pout)
    bytes_accessed = (xp.size * 4                       # f32 activations in
                      + n_packed * pout * 4             # f32 result out
                      + w1p.size * 2 + w2p.size * 2     # bf16 packed weights
                      + (ph + pout) * 4)                # f32 packed biases

    out_p = pl.pallas_call(
        _mlp_packed_kernel,
        out_shape=jax.ShapeDtypeStruct((n_packed, pout), jnp.float32),
        grid_spec=pltpu.PrefetchScalarGridSpec(
            num_scalar_prefetch=0,
            grid=grid,
            in_specs=[
                pl.BlockSpec((tile_p, pin), lambda i: (i, 0)),
                pl.BlockSpec((pin, ph), lambda i: (0, 0)),
                pl.BlockSpec((1, ph), lambda i: (0, 0)),
                pl.BlockSpec((ph, pout), lambda i: (0, 0)),
                pl.BlockSpec((1, pout), lambda i: (0, 0)),
            ],
            out_specs=pl.BlockSpec((tile_p, pout), lambda i: (i, 0)),
        ),
        compiler_params=pltpu.CompilerParams(
            dimension_semantics=("parallel",)),
        cost_estimate=pl.CostEstimate(
            flops=flops, transcendentals=0, bytes_accessed=bytes_accessed),
    )(xp, w1p, b1p, w2p, b2p)

    # Free contiguous reshape back to (N_padded, out_size); no transpose pass.
    y = out_p.reshape(n_packed * P, out_size)
    if pad:
        y = y[:N]
    return y.astype(x.dtype)


def init_params(key, in_size, out_size):
    """Deterministic init mimicking torch.nn.Linear (uniform +/- 1/sqrt(fan_in))."""
    k1, k2, k3, k4 = jax.random.split(key, 4)
    bound1 = 1.0 / jnp.sqrt(in_size)
    bound2 = 1.0 / jnp.sqrt(HIDDEN)
    w1 = jax.random.uniform(k1, (in_size, HIDDEN), jnp.float32, -bound1, bound1)
    b1 = jax.random.uniform(k2, (HIDDEN,), jnp.float32, -bound1, bound1)
    w2 = jax.random.uniform(k3, (HIDDEN, out_size), jnp.float32, -bound2, bound2)
    b2 = jax.random.uniform(k4, (out_size,), jnp.float32, -bound2, bound2)
    return w1, b1, w2, b2


if __name__ == "__main__":
    # (N, in_size) input per the module's forward(). N=2048 keeps the demo small
    # (~128 KiB of activations) while giving the Pallas path a 2-step grid.
    N, in_size, out_size = 2048, 16, 4

    key = jax.random.PRNGKey(0)
    kx, kp = jax.random.split(key)
    x = jax.random.normal(kx, (N, in_size), jnp.float32)
    w1, b1, w2, b2 = init_params(kp, in_size, out_size)

    y = neuralnet_forward(x, w1, b1, w2, b2)
    jax.block_until_ready(y)
    assert y.shape == (N, out_size)

    # Reference with the same bf16 operand quantization as the kernel (f32 accum).
    xb, w1b, w2b = (x.astype(jnp.bfloat16), w1.astype(jnp.bfloat16),
                    w2.astype(jnp.bfloat16))
    h_ref = jnp.maximum(
        jnp.dot(xb, w1b, preferred_element_type=jnp.float32) + b1, 0.0)
    y_ref = jnp.dot(h_ref.astype(jnp.bfloat16), w2b,
                    preferred_element_type=jnp.float32) + b2
    assert jnp.allclose(y, y_ref, atol=1e-2, rtol=1e-2)

    # Loose sanity check against the full-f32 forward (covers bf16 quantization).
    y_f32 = jnp.maximum(x @ w1 + b1, 0.0) @ w2 + b2
    assert jnp.allclose(y, y_f32, atol=5e-2, rtol=5e-2)

    # Tiny-batch fast path (bypasses Pallas) stays exact vs. the f32 reference.
    y_small = neuralnet_forward(x[:8], w1, b1, w2, b2)
    assert jnp.allclose(y_small, y_f32[:8], atol=1e-5, rtol=1e-5)

    # TODO(synk): step() (SGD training update) is out of scope for a forward-pass kernel.
    print("KERNEL_OK")
</pallas_src>

<mosaic_0001>
module attributes {stable_mosaic.version = 11 : i64} {
  func.func @_mlp_packed_kernel(%arg0: i32, %arg1: memref<128x128xf32, #tpu.memory_space<vmem>>, %arg2: memref<128x256xbf16, #tpu.memory_space<vmem>>, %arg3: memref<1x256xf32, #tpu.memory_space<vmem>>, %arg4: memref<256x32xbf16, #tpu.memory_space<vmem>>, %arg5: memref<1x32xf32, #tpu.memory_space<vmem>>, %arg6: memref<128x32xf32, #tpu.memory_space<vmem>>) attributes {dimension_semantics = [#tpu.dimension_semantics<parallel>], iteration_bounds = array<i64: 2>, scalar_prefetch = 0 : i64, scratch_operands = 0 : i64, tpu.core_type = #tpu.core_type<tc>, window_params = [{transform_indices = @transform_0, window_bounds = array<i64: 128, 128>}, {pipeline_mode = #tpu.pipeline_mode<synchronous>, transform_indices = @transform_1, window_bounds = array<i64: 128, 256>}, {pipeline_mode = #tpu.pipeline_mode<synchronous>, transform_indices = @transform_2, window_bounds = array<i64: 1, 256>}, {pipeline_mode = #tpu.pipeline_mode<synchronous>, transform_indices = @transform_3, window_bounds = array<i64: 256, 32>}, {pipeline_mode = #tpu.pipeline_mode<synchronous>, transform_indices = @transform_4, window_bounds = array<i64: 1, 32>}, {transform_indices = @transform_5, window_bounds = array<i64: 128, 32>}]} {
    %c0 = arith.constant 0 : index
    %c0_0 = arith.constant 0 : index
    %0 = vector.load %arg1[%c0, %c0_0] : memref<128x128xf32, #tpu.memory_space<vmem>>, vector<128x128xf32>
    %1 = arith.truncf %0 : vector<128x128xf32> to vector<128x128xbf16>
    %c0_1 = arith.constant 0 : index
    %c0_2 = arith.constant 0 : index
    %2 = vector.load %arg2[%c0_1, %c0_2] : memref<128x256xbf16, #tpu.memory_space<vmem>>, vector<128x256xbf16>
    %cst = arith.constant dense<0.000000e+00> : vector<128x256xf32>
    %3 = tpu.matmul %1, %2, %cst {dimension_numbers = #tpu.dot_dimension_numbers<[1], [0], [0], [1], [0, 0, 1, 1], [], []>} : vector<128x128xbf16>, vector<128x256xbf16>, vector<128x256xf32> -> vector<128x256xf32>
    %c0_3 = arith.constant 0 : index
    %c0_4 = arith.constant 0 : index
    %4 = vector.load %arg3[%c0_3, %c0_4] : memref<1x256xf32, #tpu.memory_space<vmem>>, vector<1x256xf32>
    %5 = vector.broadcast %4 : vector<1x256xf32> to vector<128x256xf32>
    %6 = arith.addf %3, %5 : vector<128x256xf32>
    %cst_5 = arith.constant 0.000000e+00 : f32
    %7 = vector.broadcast %cst_5 : f32 to vector<128x256xf32>
    %8 = arith.maximumf %6, %7 : vector<128x256xf32>
    %9 = arith.truncf %8 : vector<128x256xf32> to vector<128x256xbf16>
    %c0_6 = arith.constant 0 : index
    %c0_7 = arith.constant 0 : index
    %10 = vector.load %arg4[%c0_6, %c0_7] : memref<256x32xbf16, #tpu.memory_space<vmem>>, vector<256x32xbf16>
    %cst_8 = arith.constant dense<0.000000e+00> : vector<128x32xf32>
    %11 = tpu.matmul %9, %10, %cst_8 {dimension_numbers = #tpu.dot_dimension_numbers<[1], [0], [0], [1], [0, 0, 1, 1], [], []>} : vector<128x256xbf16>, vector<256x32xbf16>, vector<128x32xf32> -> vector<128x32xf32>
    %c0_9 = arith.constant 0 : index
    %c0_10 = arith.constant 0 : index
    %12 = vector.load %arg5[%c0_9, %c0_10] : memref<1x32xf32, #tpu.memory_space<vmem>>, vector<1x32xf32>
    %13 = vector.broadcast %12 : vector<1x32xf32> to vector<128x32xf32>
    %14 = arith.addf %11, %13 : vector<128x32xf32>
    %c0_11 = arith.constant 0 : index
    %c0_12 = arith.constant 0 : index
    %15 = vector.load %arg6[%c0_11, %c0_12] : memref<128x32xf32, #tpu.memory_space<vmem>>, vector<128x32xf32>
    tpu.vector_store %arg6[%c0_11, %c0_12], %14 {strides = array<i32>} : memref<128x32xf32, #tpu.memory_space<vmem>>, vector<128x32xf32>,
    return
  }
  func.func @transform_0(%arg0: i32) -> (i32, i32) {
    %c0_i32 = arith.constant 0 : i32
    %c0_i32_0 = arith.constant 0 : i32
    return %arg0, %c0_i32 : i32, i32
  }
  func.func @transform_1(%arg0: i32) -> (i32, i32) {
    %c0_i32 = arith.constant 0 : i32
    %c0_i32_0 = arith.constant 0 : i32
    %c0_i32_1 = arith.constant 0 : i32
    return %c0_i32, %c0_i32_0 : i32, i32
  }
  func.func @transform_2(%arg0: i32) -> (i32, i32) {
    %c0_i32 = arith.constant 0 : i32
    %c0_i32_0 = arith.constant 0 : i32
    %c0_i32_1 = arith.constant 0 : i32
    return %c0_i32, %c0_i32_0 : i32, i32
  }
  func.func @transform_3(%arg0: i32) -> (i32, i32) {
    %c0_i32 = arith.constant 0 : i32
    %c0_i32_0 = arith.constant 0 : i32
    %c0_i32_1 = arith.constant 0 : i32
    return %c0_i32, %c0_i32_0 : i32, i32
  }
  func.func @transform_4(%arg0: i32) -> (i32, i32) {
    %c0_i32 = arith.constant 0 : i32
    %c0_i32_0 = arith.constant 0 : i32
    %c0_i32_1 = arith.constant 0 : i32
    return %c0_i32, %c0_i32_0 : i32, i32
  }
  func.func @transform_5(%arg0: i32) -> (i32, i32) {
    %c0_i32 = arith.constant 0 : i32
    %c0_i32_0 = arith.constant 0 : i32
    return %arg0, %c0_i32 : i32, i32
  }
}

</mosaic_0001>

<llo_original>
// kernel: tpu_custom_call.1
$region0: #{tpu_custom_call.1}
  #allocation0 [shape = 'u32[]', space=smem, size = 0x4, offset = 0x4, fixed_abs, tag = 'smem constant byte address 0x4 - core index']
  #allocation1 [shape = 'u32[144,128]{1,0:T(1,128)}', space=vmem, size = 0x12000, scoped, tag = 'internal scratch']
  %s0 = inlined_call_operand.hbm [shape: f32[256,128], index: 0, kind: input, shape index: {}]
  %s1 = inlined_call_operand.vmem [shape: bf16[128,256], index: 1, kind: input, shape index: {}]
  %s2 = inlined_call_operand.vmem [shape: f32[1,256], index: 2, kind: input, shape index: {}]
  %s3 = inlined_call_operand.vmem [shape: bf16[256,32], index: 3, kind: input, shape index: {}]
  %s4 = inlined_call_operand.vmem [shape: f32[1,32], index: 4, kind: input, shape index: {}]
  %s5 = inlined_call_operand.vmem [shape: f32[256,32], index: 5, kind: output, shape index: {}]
  %s6 = sld [smem:[#allocation0]]
  $region57: #{tpu_custom_call.1} parent=0
    _
  %s8 = ssub.s32 1, %s6
  %s9 = scalar_select 0, %s8, %s6
  $region1: #{tpu_custom_call.1} parent=0
    #allocation2 [shape = 'u8[131072]{0}', space=vmem, size = 0x20000, scoped, tag = 'input window, operand 0']
    #allocation3 [shape = 's32[2]{0}', space=sflag, size = 0x8, scoped, tag = 'scoped memory for tpu_custom_call.1']
    %10 = vsyncpa [#allocation3], 0
    %s11 = scalar_lea.sflag [#allocation3], 1
    %12 = vsyncpa %s11, 0
    loop: start=0, step=1, limit=4
    $region2: #{tpu_custom_call.1} parent=1 // loop_pre_header
      _
    $region3: #{tpu_custom_call.1} parent=1 // loop_header
      %s14 = sphi 0, %s18
      %p15 = scmp.ge.s32.totalorder %s14, 4
      %s24 = sphi 0, %s26
      %s27 = sphi 0, %s24
      %s28 = sphi 0, %s27
      %s44 = sphi 0, %s28
      %s48 = sphi 0, %s48
      %s50 = sphi 0, %s48
      %s51 = sphi 0, %s50
      %s65 = sphi 0, %s51
      %s69 = sphi 0, %s69
      %s71 = sphi 0, %s69
      %s72 = sphi 0, %s71
      %s86 = sphi 0, %s72
      %s90 = sphi 0, %s90
      %s92 = sphi 0, %s90
      %s93 = sphi 0, %s92
      %s107 = sphi 0, %s93
      %s111 = sphi 0, %s111
      %s113 = sphi 0, %s111
      %s114 = sphi 0, %s113
      %s128 = sphi 0, %s114
      %s134 = sphi 0, %s136
      %s137 = sphi 0, %s134
      %s138 = sphi 0, %s137
      %s154 = sphi 0, %s138
    $region4: #{tpu_custom_call.1} parent=1 // loop_header_branch
      %17 = sbr.rel (%p15) target = $region8
    $region5: #{tpu_custom_call.1} parent=1 // loop_body
      %s19 = ssub.s32 %s14, 1
      %s20 = ssub.s32 %s14, 2
      %s21 = sadd.s32 %s14, 1
      %s22 = ssub.s32 %s14, %s21
      %p23 = scmp.eq.s32.totalorder %s22, 0
      %s25 = sadd.s32 %s24, 1
      %s26 = scalar_select %p23, %s24, %s25
      %p29 = pneg %p23
      %p30 = scmp.eq.s32.totalorder %s14, 1
      %p31 = por %p29, %p30
      %p32 = scmp.ne.s32.totalorder %s24, %s27
      %p33 = scmp.eq.s32.totalorder %s14, 0
      %p34 = por %p32, %p33
      %p35 = scmp.ne.s32.totalorder %s24, %s27
      %p36 = scmp.eq.s32.totalorder %s19, 1
      %p37 = por %p35, %p36
      %p38 = scmp.ne.s32.totalorder %s27, %s28
      %p39 = scmp.eq.s32.totalorder %s19, 0
      %p40 = por %p38, %p39
      %p41 = scmp.ne.s32.totalorder %s27, %s28
      %p42 = scmp.eq.s32.totalorder %s20, 1
      %p43 = por %p41, %p42
      %p45 = scmp.ne.s32.totalorder %s28, %s44
      %p46 = scmp.eq.s32.totalorder %s20, 0
      %p47 = por %p45, %p46
      %s49 = sadd.s32 %s48, 1
      %p52 = scmp.eq.s32.totalorder %s14, 1
      %p53 = scmp.ne.s32.totalorder %s48, %s50
      %p54 = scmp.eq.s32.totalorder %s14, 0
      %p55 = por %p53, %p54
      %p56 = scmp.ne.s32.totalorder %s48, %s50
      %p57 = scmp.eq.s32.totalorder %s19, 1
      %p58 = por %p56, %p57
      %p59 = scmp.ne.s32.totalorder %s50, %s51
      %p60 = scmp.eq.s32.totalorder %s19, 0
      %p61 = por %p59, %p60
      %p62 = scmp.ne.s32.totalorder %s50, %s51
      %p63 = scmp.eq.s32.totalorder %s20, 1
      %p64 = por %p62, %p63
      %p66 = scmp.ne.s32.totalorder %s51, %s65
      %p67 = scmp.eq.s32.totalorder %s20, 0
      %p68 = por %p66, %p67
      %s70 = sadd.s32 %s69, 1
      %p73 = scmp.eq.s32.totalorder %s14, 1
      %p74 = scmp.ne.s32.totalorder %s69, %s71
      %p75 = scmp.eq.s32.totalorder %s14, 0
      %p76 = por %p74, %p75
      %p77 = scmp.ne.s32.totalorder %s69, %s71
      %p78 = scmp.eq.s32.totalorder %s19, 1
      %p79 = por %p77, %p78
      %p80 = scmp.ne.s32.totalorder %s71, %s72
      %p81 = scmp.eq.s32.totalorder %s19, 0
      %p82 = por %p80, %p81
      %p83 = scmp.ne.s32.totalorder %s71, %s72
      %p84 = scmp.eq.s32.totalorder %s20, 1
      %p85 = por %p83, %p84
      %p87 = scmp.ne.s32.totalorder %s72, %s86
      %p88 = scmp.eq.s32.totalorder %s20, 0
      %p89 = por %p87, %p88
      %s91 = sadd.s32 %s90, 1
      %p94 = scmp.eq.s32.totalorder %s14, 1
      %p95 = scmp.ne.s32.totalorder %s90, %s92
      %p96 = scmp.eq.s32.totalorder %s14, 0
      %p97 = por %p95, %p96
      %p98 = scmp.ne.s32.totalorder %s90, %s92
      %p99 = scmp.eq.s32.totalorder %s19, 1
      %p100 = por %p98, %p99
      %p101 = scmp.ne.s32.totalorder %s92, %s93
      %p102 = scmp.eq.s32.totalorder %s19, 0
      %p103 = por %p101, %p102
      %p104 = scmp.ne.s32.totalorder %s92, %s93
      %p105 = scmp.eq.s32.totalorder %s20, 1
      %p106 = por %p104, %p105
      %p108 = scmp.ne.s32.totalorder %s93, %s107
      %p109 = scmp.eq.s32.totalorder %s20, 0
      %p110 = por %p108, %p109
      %s112 = sadd.s32 %s111, 1
      %p115 = scmp.eq.s32.totalorder %s14, 1
      %p116 = scmp.ne.s32.totalorder %s111, %s113
      %p117 = scmp.eq.s32.totalorder %s14, 0
      %p118 = por %p116, %p117
      %p119 = scmp.ne.s32.totalorder %s111, %s113
      %p120 = scmp.eq.s32.totalorder %s19, 1
      %p121 = por %p119, %p120
      %p122 = scmp.ne.s32.totalorder %s113, %s114
      %p123 = scmp.eq.s32.totalorder %s19, 0
      %p124 = por %p122, %p123
      %p125 = scmp.ne.s32.totalorder %s113, %s114
      %p126 = scmp.eq.s32.totalorder %s20, 1
      %p127 = por %p125, %p126
      %p129 = scmp.ne.s32.totalorder %s114, %s128
      %p130 = scmp.eq.s32.totalorder %s20, 0
      %p131 = por %p129, %p130
      %s132 = ssub.s32 %s14, %s21
      %p133 = scmp.eq.s32.totalorder %s132, 0
      %s135 = sadd.s32 %s134, 1
      %s136 = scalar_select %p133, %s134, %s135
      %p139 = pneg %p133
      %p140 = scmp.eq.s32.totalorder %s14, 1
      %p141 = por %p139, %p140
      %p142 = scmp.ne.s32.totalorder %s134, %s137
      %p143 = scmp.eq.s32.totalorder %s14, 0
      %p144 = por %p142, %p143
      %p145 = scmp.ne.s32.totalorder %s134, %s137
      %p146 = scmp.eq.s32.totalorder %s19, 1
      %p147 = por %p145, %p146
      %p148 = scmp.ne.s32.totalorder %s137, %s138
      %p149 = scmp.eq.s32.totalorder %s19, 0
      %p150 = por %p148, %p149
      %p151 = scmp.ne.s32.totalorder %s137, %s138
      %p152 = scmp.eq.s32.totalorder %s20, 1
      %p153 = por %p151, %p152
      %p155 = scmp.ne.s32.totalorder %s138, %s154
      %p156 = scmp.eq.s32.totalorder %s20, 0
      %p157 = por %p155, %p156
      %p158 = scmp.le.s32.totalorder 1, %s14
      %p159 = scmp.lt.s32.totalorder %s14, 3
      %p160 = pnand %p158, %p159
      %p161 = pneg %p160
      // Predicated region
      $region9: #{tpu_custom_call.1} parent=5 // pred_check
        _
      $region10: #{tpu_custom_call.1} parent=5 // pred_check_branch
        %163 = sbr.rel (%p160) target = $region12
      $region11: #{tpu_custom_call.1} parent=5 // pred_region
        %s164 = ssub.s32 %s14, 1
        // Predicated region
        $region13: #{tpu_custom_call.1} parent=11 // pred_check
          %p165 = pneg %p61
        $region14: #{tpu_custom_call.1} parent=11 // pred_check_branch
          %167 = sbr.rel (%p165) target = $region16
        $region15: #{tpu_custom_call.1} parent=11 // pred_region
          _
        $region16: #{tpu_custom_call.1} parent=11 // pred_fallthru
          _
        // Predicated region
        $region17: #{tpu_custom_call.1} parent=11 // pred_check
          %p168 = pneg %p82
        $region18: #{tpu_custom_call.1} parent=11 // pred_check_branch
          %170 = sbr.rel (%p168) target = $region20
        $region19: #{tpu_custom_call.1} parent=11 // pred_region
          _
        $region20: #{tpu_custom_call.1} parent=11 // pred_fallthru
          _
        // Predicated region
        $region21: #{tpu_custom_call.1} parent=11 // pred_check
          %p171 = pneg %p103
        $region22: #{tpu_custom_call.1} parent=11 // pred_check_branch
          %173 = sbr.rel (%p171) target = $region24
        $region23: #{tpu_custom_call.1} parent=11 // pred_region
          _
        $region24: #{tpu_custom_call.1} parent=11 // pred_fallthru
          _
        // Predicated region
        $region25: #{tpu_custom_call.1} parent=11 // pred_check
          %p174 = pneg %p124
        $region26: #{tpu_custom_call.1} parent=11 // pred_check_branch
          %176 = sbr.rel (%p174) target = $region28
        $region27: #{tpu_custom_call.1} parent=11 // pred_region
          _
        $region28: #{tpu_custom_call.1} parent=11 // pred_fallthru
          _
      $region12: #{tpu_custom_call.1} parent=5 // pred_fallthru
        _
      %p177 = scmp.lt.s32.totalorder %s14, 2
      // Predicated region
      $region29: #{tpu_custom_call.1} parent=5 // pred_check
        %p178 = pneg %p177
      $region30: #{tpu_custom_call.1} parent=5 // pred_check_branch
        %180 = sbr.rel (%p178) target = $region32
      $region31: #{tpu_custom_call.1} parent=5 // pred_region
        // Predicated region
        $region33: #{tpu_custom_call.1} parent=31 // pred_check
          %p181 = pneg %p34
        $region34: #{tpu_custom_call.1} parent=31 // pred_check_branch
          %183 = sbr.rel (%p181) target = $region36
        $region35: #{tpu_custom_call.1} parent=31 // pred_region
          %s184 = sand.u32 %s24, 1
          %s185 = scalar_lea.sflag [#allocation3], %s184
          %s186 = sand.u32 %s24, 1
          %s187 = smul.addr %s186, 128
          %s188 = scalar_lea.vmem [#allocation2], %s187
          %s189 = smul.u32 16, %s14
          %s191 = ssub.s32 2048, 2048
          %192 = vsyncadd %s185, %s191
          %s193 = smul.addr %s189, 128
          %s194 = scalar_lea.hbm %s0, %s193
          %s195 = sshll.u32 %s188, 4
          %s196 = int_to_ptr.vmem [resolvable:$true] %s195
          %201 = dma.hbm_to_vmem [thread:$0]  %s194, 2048, %s196, %s185, 128, 128, 8
        $region36: #{tpu_custom_call.1} parent=31 // pred_fallthru
          _
      $region32: #{tpu_custom_call.1} parent=5 // pred_fallthru
        _
      %p202 = scmp.le.s32.totalorder 1, %s14
      %p203 = scmp.lt.s32.totalorder %s14, 3
      %p204 = pnand %p202, %p203
      %p205 = pneg %p204
      // Predicated region
      $region37: #{tpu_custom_call.1} parent=5 // pred_check
        _
      $region38: #{tpu_custom_call.1} parent=5 // pred_check_branch
        %207 = sbr.rel (%p204) target = $region40
      $region39: #{tpu_custom_call.1} parent=5 // pred_region
        %s208 = ssub.s32 %s14, 1
        %s209 = sand.u32 %s27, 1
        %s210 = scalar_lea.sflag [#allocation3], %s209
        %s211 = sand.u32 %s27, 1
        %s212 = smul.addr %s211, 128
        %s213 = scalar_lea.vmem [#allocation2], %s212
        // Predicated region
        $region41: #{tpu_custom_call.1} parent=39 // pred_check
          %p214 = pneg %p40
        $region42: #{tpu_custom_call.1} parent=39 // pred_check_branch
          %216 = sbr.rel (%p214) target = $region44
        $region43: #{tpu_custom_call.1} parent=39 // pred_region
          %217 = dma.done %s210, 2048
        $region44: #{tpu_custom_call.1} parent=39 // pred_fallthru
          _
        %s218 = sand.u32 %s27, 1
        %s219 = scalar_lea.sflag [#allocation3], %s218
        %s220 = sand.u32 %s27, 1
        %s221 = smul.addr %s220, 128
        %s222 = scalar_lea.vmem [#allocation2], %s221
        %p223 = pneg %p40
        %p224 = pneg %p37
        %p225 = pneg %p61
        %p226 = pneg %p58
        %p227 = pneg %p82
        %p228 = pneg %p79
        %p229 = pneg %p103
        %p230 = pneg %p100
        %p231 = pneg %p124
        %p232 = pneg %p121
        %p233 = pneg %p150
        %p234 = pneg %p147
        %s235 = smul.u32 16, %s19
        %p236 = scmp.lt.s32.totalorder %s235, 31
        %s237 = scalar_select %p236, %s235, 31
        %s238 = smul.addr %s237, 8
        %s239 = scalar_lea.vmem %s5, %s238
        %s240 = smul.u32 16, %s19
        %s241 = smul.u32 16, %s19
        %p242 = scmp.lt.s32.totalorder %s241, 31
        %s243 = scalar_select %p242, %s241, 31
        %s244 = smul.addr %s243, 8
        %s245 = scalar_lea.vmem %s5, %s244
        %s246 = smul.u32 16, %s19
        %v248 = vld [vmem:[%s213] sm:$0xff]
        %v249 = vld [vmem:[%s213 + $0x8] sm:$0xff]
        %v250 = vld [vmem:[%s213 + $0x10] sm:$0xff]
        %v251 = vld [vmem:[%s213 + $0x18] sm:$0xff]
        %v252 = vld [vmem:[%s213 + $0x20] sm:$0xff]
        %v253 = vld [vmem:[%s213 + $0x28] sm:$0xff]
        %v254 = vld [vmem:[%s213 + $0x30] sm:$0xff]
        %v255 = vld [vmem:[%s213 + $0x38] sm:$0xff]
        %v256 = vld [vmem:[%s213 + $0x40] sm:$0xff]
        %v257 = vld [vmem:[%s213 + $0x48] sm:$0xff]
        %v258 = vld [vmem:[%s213 + $0x50] sm:$0xff]
        %v259 = vld [vmem:[%s213 + $0x58] sm:$0xff]
        %v260 = vld [vmem:[%s213 + $0x60] sm:$0xff]
        %v261 = vld [vmem:[%s213 + $0x68] sm:$0xff]
        %v262 = vld [vmem:[%s213 + $0x70] sm:$0xff]
        %v263 = vld [vmem:[%s213 + $0x78] sm:$0xff]
        %v264 = vpack.c.bf16 %v249, %v248
        %v265 = vpack.c.bf16 %v251, %v250
        %v266 = vpack.c.bf16 %v253, %v252
        %v267 = vpack.c.bf16 %v255, %v254
        %v268 = vpack.c.bf16 %v257, %v256
        %v269 = vpack.c.bf16 %v259, %v258
        %v270 = vpack.c.bf16 %v261, %v260
        %v271 = vpack.c.bf16 %v263, %v262
        %v272 = vld [vmem:[%s1] sm:$0xff]
        %v273 = vld [vmem:[%s1 + $0x8] sm:$0xff]
        %v274 = vld [vmem:[%s1 + $0x10] sm:$0xff]
        %v275 = vld [vmem:[%s1 + $0x18] sm:$0xff]
        %v276 = vld [vmem:[%s1 + $0x20] sm:$0xff]
        %v277 = vld [vmem:[%s1 + $0x28] sm:$0xff]
        %v278 = vld [vmem:[%s1 + $0x30] sm:$0xff]
        %v279 = vld [vmem:[%s1 + $0x38] sm:$0xff]
        %v280 = vld [vmem:[%s1 + $0x40] sm:$0xff]
        %v281 = vld [vmem:[%s1 + $0x48] sm:$0xff]
        %v282 = vld [vmem:[%s1 + $0x50] sm:$0xff]
        %v283 = vld [vmem:[%s1 + $0x58] sm:$0xff]
        %v284 = vld [vmem:[%s1 + $0x60] sm:$0xff]
        %v285 = vld [vmem:[%s1 + $0x68] sm:$0xff]
        %v286 = vld [vmem:[%s1 + $0x70] sm:$0xff]
        %v287 = vld [vmem:[%s1 + $0x78] sm:$0xff]
        %v288 = vld [vmem:[%s2] sm:$0x3]
        %v290 = vlaneseq
        %v291 = vshrl.u32 %v290, 7
        %v292 = vsub.s32 0, %v291
        %v293 = vrot.slane %v288, %v292
        %v294 = vlaneseq
        %v295 = vshrl.u32 %v294, 7
        %v296 = vsub.s32 1, %v295
        %v297 = vrot.slane %v288, %v296
        %v316 = vunpack.c.l.b16 %v272
        %v317 = vunpack.c.h.b16 %v272
        %v318 = vunpack.c.l.b16 %v273
        %v319 = vunpack.c.h.b16 %v273
        %v320 = vunpack.c.l.b16 %v274
        %v321 = vunpack.c.h.b16 %v274
        %v322 = vunpack.c.l.b16 %v275
        %v323 = vunpack.c.h.b16 %v275
        %v324 = vunpack.c.l.b16 %v276
        %v325 = vunpack.c.h.b16 %v276
        %v326 = vunpack.c.l.b16 %v277
        %v327 = vunpack.c.h.b16 %v277
        %v328 = vunpack.c.l.b16 %v278
        %v329 = vunpack.c.h.b16 %v278
        %v330 = vunpack.c.l.b16 %v279
        %v331 = vunpack.c.h.b16 %v279
        %v332 = vunpack.c.l.b16 %v280
        %v333 = vunpack.c.h.b16 %v280
        %v334 = vunpack.c.l.b16 %v281
        %v335 = vunpack.c.h.b16 %v281
        %v336 = vunpack.c.l.b16 %v282
        %v337 = vunpack.c.h.b16 %v282
        %v338 = vunpack.c.l.b16 %v283
        %v339 = vunpack.c.h.b16 %v283
        %v340 = vunpack.c.l.b16 %v284
        %v341 = vunpack.c.h.b16 %v284
        %v342 = vunpack.c.l.b16 %v285
        %v343 = vunpack.c.h.b16 %v285
        %v344 = vunpack.c.l.b16 %v286
        %v345 = vunpack.c.h.b16 %v286
        %v346 = vunpack.c.l.b16 %v287
        %v347 = vunpack.c.h.b16 %v287
        %v348 = vpack.c.b16 %v318, %v316
        %v349 = vpack.c.b16 %v319, %v317
        %v350 = vpack.c.b16 %v322, %v320
        %v351 = vpack.c.b16 %v323, %v321
        %v352 = vpack.c.b16 %v326, %v324
        %v353 = vpack.c.b16 %v327, %v325
        %v354 = vpack.c.b16 %v330, %v328
        %v355 = vpack.c.b16 %v331, %v329
        %v356 = vpack.c.b16 %v334, %v332
        %v357 = vpack.c.b16 %v335, %v333
        %v358 = vpack.c.b16 %v338, %v336
        %v359 = vpack.c.b16 %v339, %v337
        %v360 = vpack.c.b16 %v342, %v340
        %v361 = vpack.c.b16 %v343, %v341
        %v362 = vpack.c.b16 %v346, %v344
        %v363 = vpack.c.b16 %v347, %v345
        %380 = vmatprep.subr.bf16.mxu0 %v349
        %381 = vmatpush1.bf16.msra.mxu0 %v348
        %382 = vmatprep.subr.bf16.mxu0 %v351
        %383 = vmatpush1.bf16.msra.mxu0 %v350
        %384 = vmatprep.subr.bf16.mxu0 %v353
        %385 = vmatpush1.bf16.msra.mxu0 %v352
        %386 = vmatprep.subr.bf16.mxu0 %v355
        %387 = vmatpush1.bf16.msra.mxu0 %v354
        %388 = vmatprep.subr.bf16.mxu0 %v357
        %389 = vmatpush1.bf16.msra.mxu0 %v356
        %390 = vmatprep.subr.bf16.mxu0 %v359
        %391 = vmatpush1.bf16.msra.mxu0 %v358
        %392 = vmatprep.subr.bf16.mxu0 %v361
        %393 = vmatpush1.bf16.msra.mxu0 %v360
        %394 = vmatprep.subr.bf16.mxu0 %v363
        %395 = vmatpush1.bf16.msra.mxu0 %v362
        %396 = vmatprep.subr.bf16.mxu0 0
        %397 = vmatpush1.bf16.msra.mxu0 0
        %398 = vmatprep.subr.bf16.mxu0 0
        %399 = vmatpush1.bf16.msra.mxu0 0
        %400 = vmatprep.subr.bf16.mxu0 0
        %401 = vmatpush1.bf16.msra.mxu0 0
        %402 = vmatprep.subr.bf16.mxu0 0
        %403 = vmatpush1.bf16.msra.mxu0 0
        %404 = vmatprep.subr.bf16.mxu0 0
        %405 = vmatpush1.bf16.msra.mxu0 0
        %406 = vmatprep.subr.bf16.mxu0 0
        %407 = vmatpush1.bf16.msra.mxu0 0
        %408 = vmatprep.subr.bf16.mxu0 0
        %409 = vmatpush1.bf16.msra.mxu0 0
        %410 = vmatprep.subr.bf16.mxu0 0
        %411 = vmatpush1.bf16.msra.mxu0 0
        %412 = vmatprep.mubr.bf16.mxu0 0
        %413 = vmatmul.mubr.bf16.gmra.mrb[0].mxu0 %v264
        %v414 = vpop.f32.mrb[0].mxu0
        %v415 = vadd.f32 %v293, %v414
        %v416 = vpop.f32.mrb[0].mxu0
        %v417 = vadd.f32 %v297, %v416
        %v418 = vpop.f32.mrb[0].mxu0
        %v419 = vadd.f32 %v293, %v418
        %v420 = vpop.f32.mrb[0].mxu0
        %v421 = vadd.f32 %v297, %v420
        %422 = vmatprep.mubr.bf16.mxu0 0
        %423 = vmatmul.mubr.bf16.gmra.mrb[0].mxu0 %v265
        %v424 = vpop.f32.mrb[0].mxu0
        %v425 = vadd.f32 %v293, %v424
        %v426 = vpop.f32.mrb[0].mxu0
        %v427 = vadd.f32 %v297, %v426
        %v428 = vpop.f32.mrb[0].mxu0
        %v429 = vadd.f32 %v293, %v428
        %v430 = vpop.f32.mrb[0].mxu0
        %v431 = vadd.f32 %v297, %v430
        %432 = vmatprep.mubr.bf16.mxu0 0
        %433 = vmatmul.mubr.bf16.gmra.mrb[0].mxu0 %v266
        %v434 = vpop.f32.mrb[0].mxu0
        %v435 = vadd.f32 %v293, %v434
        %v436 = vpop.f32.mrb[0].mxu0
        %v437 = vadd.f32 %v297, %v436
        %v438 = vpop.f32.mrb[0].mxu0
        %v439 = vadd.f32 %v293, %v438
        %v440 = vpop.f32.mrb[0].mxu0
        %v441 = vadd.f32 %v297, %v440
        %442 = vmatprep.mubr.bf16.mxu0 0
        %443 = vmatmul.mubr.bf16.gmra.mrb[0].mxu0 %v267
        %v444 = vpop.f32.mrb[0].mxu0
        %v445 = vadd.f32 %v293, %v444
        %v446 = vpop.f32.mrb[0].mxu0
        %v447 = vadd.f32 %v297, %v446
        %v448 = vpop.f32.mrb[0].mxu0
        %v449 = vadd.f32 %v293, %v448
        %v450 = vpop.f32.mrb[0].mxu0
        %v451 = vadd.f32 %v297, %v450
        %452 = vmatprep.mubr.bf16.mxu0 0
        %453 = vmatmul.mubr.bf16.gmra.mrb[0].mxu0 %v268
        %v454 = vpop.f32.mrb[0].mxu0
        %v455 = vadd.f32 %v293, %v454
        %v456 = vpop.f32.mrb[0].mxu0
        %v457 = vadd.f32 %v297, %v456
        %v458 = vpop.f32.mrb[0].mxu0
        %v459 = vadd.f32 %v293, %v458
        %v460 = vpop.f32.mrb[0].mxu0
        %v461 = vadd.f32 %v297, %v460
        %462 = vmatprep.mubr.bf16.mxu0 0
        %463 = vmatmul.mubr.bf16.gmra.mrb[0].mxu0 %v269
        %v464 = vpop.f32.mrb[0].mxu0
        %v465 = vadd.f32 %v293, %v464
        %v466 = vpop.f32.mrb[0].mxu0
        %v467 = vadd.f32 %v297, %v466
        %v468 = vpop.f32.mrb[0].mxu0
        %v469 = vadd.f32 %v293, %v468
        %v470 = vpop.f32.mrb[0].mxu0
        %v471 = vadd.f32 %v297, %v470
        %472 = vmatprep.mubr.bf16.mxu0 0
        %473 = vmatmul.mubr.bf16.gmra.mrb[0].mxu0 %v270
        %v474 = vpop.f32.mrb[0].mxu0
        %v475 = vadd.f32 %v293, %v474
        %v476 = vpop.f32.mrb[0].mxu0
        %v477 = vadd.f32 %v297, %v476
        %v478 = vpop.f32.mrb[0].mxu0
        %v479 = vadd.f32 %v293, %v478
        %v480 = vpop.f32.mrb[0].mxu0
        %v481 = vadd.f32 %v297, %v480
        %482 = vmatprep.mubr.bf16.mxu0 0
        %483 = vmatmul.mubr.bf16.gmra.mrb[0].mxu0 %v271
        %v484 = vpop.f32.mrb[0].mxu0
        %v485 = vadd.f32 %v293, %v484
        %v486 = vpop.f32.mrb[0].mxu0
        %v487 = vadd.f32 %v297, %v486
        %v488 = vpop.f32.mrb[0].mxu0
        %v489 = vadd.f32 %v293, %v488
        %v490 = vpop.f32.mrb[0].mxu0
        %v491 = vadd.f32 %v297, %v490
        %492 = vdwg.mxu0
        %v493 = vmax.f32 %v415, 0.0
        %v494 = vmax.f32 %v417, 0.0
        %v495 = vmax.f32 %v419, 0.0
        %v496 = vmax.f32 %v421, 0.0
        %v497 = vmax.f32 %v425, 0.0
        %v498 = vmax.f32 %v427, 0.0
        %v499 = vmax.f32 %v429, 0.0
        %v500 = vmax.f32 %v431, 0.0
        %v501 = vmax.f32 %v435, 0.0
        %v502 = vmax.f32 %v437, 0.0
        %v503 = vmax.f32 %v439, 0.0
        %v504 = vmax.f32 %v441, 0.0
        %v505 = vmax.f32 %v445, 0.0
        %v506 = vmax.f32 %v447, 0.0
        %v507 = vmax.f32 %v449, 0.0
        %v508 = vmax.f32 %v451, 0.0
        %v509 = vmax.f32 %v455, 0.0
        %v510 = vmax.f32 %v457, 0.0
        %v511 = vmax.f32 %v459, 0.0
        %v512 = vmax.f32 %v461, 0.0
        %v513 = vmax.f32 %v465, 0.0
        %v514 = vmax.f32 %v467, 0.0
        %v515 = vmax.f32 %v469, 0.0
        %v516 = vmax.f32 %v471, 0.0
        %v517 = vmax.f32 %v475, 0.0
        %v518 = vmax.f32 %v477, 0.0
        %v519 = vmax.f32 %v479, 0.0
        %v520 = vmax.f32 %v481, 0.0
        %v521 = vmax.f32 %v485, 0.0
        %v522 = vmax.f32 %v487, 0.0
        %v523 = vmax.f32 %v489, 0.0
        %v524 = vmax.f32 %v491, 0.0
        %v525 = vpack.c.bf16 %v495, %v493
        %v526 = vpack.c.bf16 %v496, %v494
        %v527 = vpack.c.bf16 %v499, %v497
        %v528 = vpack.c.bf16 %v500, %v498
        %v529 = vpack.c.bf16 %v503, %v501
        %v530 = vpack.c.bf16 %v504, %v502
        %v531 = vpack.c.bf16 %v507, %v505
        %v532 = vpack.c.bf16 %v508, %v506
        %v533 = vpack.c.bf16 %v511, %v509
        %v534 = vpack.c.bf16 %v512, %v510
        %v535 = vpack.c.bf16 %v515, %v513
        %v536 = vpack.c.bf16 %v516, %v514
        %v537 = vpack.c.bf16 %v519, %v517
        %v538 = vpack.c.bf16 %v520, %v518
        %v539 = vpack.c.bf16 %v523, %v521
        %v540 = vpack.c.bf16 %v524, %v522
        %v541 = vld [vmem:[%s3] sm:$0xf]
        %v542 = vld [vmem:[%s3 + $0x4] sm:$0xf]
        %v543 = vld [vmem:[%s3 + $0x8] sm:$0xf]
        %v544 = vld [vmem:[%s3 + $0xc] sm:$0xf]
        %v545 = vld [vmem:[%s3 + $0x10] sm:$0xf]
        %v546 = vld [vmem:[%s3 + $0x14] sm:$0xf]
        %v547 = vld [vmem:[%s3 + $0x18] sm:$0xf]
        %v548 = vld [vmem:[%s3 + $0x1c] sm:$0xf]
        %v549 = vld [vmem:[%s3 + $0x20] sm:$0xf]
        %v550 = vld [vmem:[%s3 + $0x24] sm:$0xf]
        %v551 = vld [vmem:[%s3 + $0x28] sm:$0xf]
        %v552 = vld [vmem:[%s3 + $0x2c] sm:$0xf]
        %v553 = vld [vmem:[%s3 + $0x30] sm:$0xf]
        %v554 = vld [vmem:[%s3 + $0x34] sm:$0xf]
        %v555 = vld [vmem:[%s3 + $0x38] sm:$0xf]
        %v556 = vld [vmem:[%s3 + $0x3c] sm:$0xf]
        %v557 = vld [vmem:[%s3 + $0x40] sm:$0xf]
        %v558 = vld [vmem:[%s3 + $0x44] sm:$0xf]
        %v559 = vld [vmem:[%s3 + $0x48] sm:$0xf]
        %v560 = vld [vmem:[%s3 + $0x4c] sm:$0xf]
        %v561 = vld [vmem:[%s3 + $0x50] sm:$0xf]
        %v562 = vld [vmem:[%s3 + $0x54] sm:$0xf]
        %v563 = vld [vmem:[%s3 + $0x58] sm:$0xf]
        %v564 = vld [vmem:[%s3 + $0x5c] sm:$0xf]
        %v565 = vld [vmem:[%s3 + $0x60] sm:$0xf]
        %v566 = vld [vmem:[%s3 + $0x64] sm:$0xf]
        %v567 = vld [vmem:[%s3 + $0x68] sm:$0xf]
        %v568 = vld [vmem:[%s3 + $0x6c] sm:$0xf]
        %v569 = vld [vmem:[%s3 + $0x70] sm:$0xf]
        %v570 = vld [vmem:[%s3 + $0x74] sm:$0xf]
        %v571 = vld [vmem:[%s3 + $0x78] sm:$0xf]
        %v572 = vld [vmem:[%s3 + $0x7c] sm:$0xf]
        %v573 = vld [vmem:[%s4] sm:$0x1]
        %v575 = vlaneseq
        %v576 = vshrl.u32 %v575, 7
        %v577 = vsub.s32 0, %v576
        %v578 = vrot.slane %v573, %v577
        %v612 = vunpack.c.l.b16 %v541
        %v613 = vunpack.c.l.b16 %v542
        %v614 = vunpack.c.l.b16 %v543
        %v615 = vunpack.c.l.b16 %v544
        %v616 = vunpack.c.l.b16 %v545
        %v617 = vunpack.c.l.b16 %v546
        %v618 = vunpack.c.l.b16 %v547
        %v619 = vunpack.c.l.b16 %v548
        %v620 = vunpack.c.l.b16 %v549
        %v621 = vunpack.c.l.b16 %v550
        %v622 = vunpack.c.l.b16 %v551
        %v623 = vunpack.c.l.b16 %v552
        %v624 = vunpack.c.l.b16 %v553
        %v625 = vunpack.c.l.b16 %v554
        %v626 = vunpack.c.l.b16 %v555
        %v627 = vunpack.c.l.b16 %v556
        %v628 = vunpack.c.l.b16 %v557
        %v629 = vunpack.c.l.b16 %v558
        %v630 = vunpack.c.l.b16 %v559
        %v631 = vunpack.c.l.b16 %v560
        %v632 = vunpack.c.l.b16 %v561
        %v633 = vunpack.c.l.b16 %v562
        %v634 = vunpack.c.l.b16 %v563
        %v635 = vunpack.c.l.b16 %v564
        %v636 = vunpack.c.l.b16 %v565
        %v637 = vunpack.c.l.b16 %v566
        %v638 = vunpack.c.l.b16 %v567
        %v639 = vunpack.c.l.b16 %v568
        %v640 = vunpack.c.l.b16 %v569
        %v641 = vunpack.c.l.b16 %v570
        %v642 = vunpack.c.l.b16 %v571
        %v643 = vunpack.c.l.b16 %v572
        %v644 = vpack.c.b16 %v613, %v612
        %v645 = vpack.c.b16 %v615, %v614
        %v646 = vpack.c.b16 %v617, %v616
        %v647 = vpack.c.b16 %v619, %v618
        %v648 = vpack.c.b16 %v621, %v620
        %v649 = vpack.c.b16 %v623, %v622
        %v650 = vpack.c.b16 %v625, %v624
        %v651 = vpack.c.b16 %v627, %v626
        %v652 = vpack.c.b16 %v629, %v628
        %v653 = vpack.c.b16 %v631, %v630
        %v654 = vpack.c.b16 %v633, %v632
        %v655 = vpack.c.b16 %v635, %v634
        %v656 = vpack.c.b16 %v637, %v636
        %v657 = vpack.c.b16 %v639, %v638
        %v658 = vpack.c.b16 %v641, %v640
        %v659 = vpack.c.b16 %v643, %v642
        %676 = vmatprep.subr.bf16.mxu0 0
        %677 = vmatpush1.bf16.msra.mxu0 %v644
        %678 = vmatprep.subr.bf16.mxu0 0
        %679 = vmatpush1.bf16.msra.mxu0 %v645
        %680 = vmatprep.subr.bf16.mxu0 0
        %681 = vmatpush1.bf16.msra.mxu0 %v646
        %682 = vmatprep.subr.bf16.mxu0 0
        %683 = vmatpush1.bf16.msra.mxu0 %v647
        %684 = vmatprep.subr.bf16.mxu0 0
        %685 = vmatpush1.bf16.msra.mxu0 %v648
        %686 = vmatprep.subr.bf16.mxu0 0
        %687 = vmatpush1.bf16.msra.mxu0 %v649
        %688 = vmatprep.subr.bf16.mxu0 0
        %689 = vmatpush1.bf16.msra.mxu0 %v650
        %690 = vmatprep.subr.bf16.mxu0 0
        %691 = vmatpush1.bf16.msra.mxu0 %v651
        %692 = vmatprep.subr.bf16.mxu0 0
        %693 = vmatpush1.bf16.msra.mxu0 %v652
        %694 = vmatprep.subr.bf16.mxu0 0
        %695 = vmatpush1.bf16.msra.mxu0 %v653
        %696 = vmatprep.subr.bf16.mxu0 0
        %697 = vmatpush1.bf16.msra.mxu0 %v654
        %698 = vmatprep.subr.bf16.mxu0 0
        %699 = vmatpush1.bf16.msra.mxu0 %v655
        %700 = vmatprep.subr.bf16.mxu0 0
        %701 = vmatpush1.bf16.msra.mxu0 %v656
        %702 = vmatprep.subr.bf16.mxu0 0
        %703 = vmatpush1.bf16.msra.mxu0 %v657
        %704 = vmatprep.subr.bf16.mxu0 0
        %705 = vmatpush1.bf16.msra.mxu0 %v658
        %706 = vmatprep.subr.bf16.mxu0 0
        %707 = vmatpush1.bf16.msra.mxu0 %v659
        %708 = vmatprep.mubr.bf16.mxu0 %v526
        %709 = vmatmul.mubr.bf16.gmra.mrb[0].mxu0 %v525
        %v710 = vpop.f32.mrb[0].mxu0
        %v711 = vadd.f32 %v578, %v710
        %v712 = vpop.f32.mrb[0].mxu0
        %v713 = vpop.f32.mrb[0].mxu0
        %v714 = vadd.f32 %v578, %v713
        %v715 = vpop.f32.mrb[0].mxu0
        %716 = vmatprep.mubr.bf16.mxu0 %v528
        %717 = vmatmul.mubr.bf16.gmra.mrb[0].mxu0 %v527
        %v718 = vpop.f32.mrb[0].mxu0
        %v719 = vadd.f32 %v578, %v718
        %v720 = vpop.f32.mrb[0].mxu0
        %v721 = vpop.f32.mrb[0].mxu0
        %v722 = vadd.f32 %v578, %v721
        %v723 = vpop.f32.mrb[0].mxu0
        %724 = vmatprep.mubr.bf16.mxu0 %v530
        %725 = vmatmul.mubr.bf16.gmra.mrb[0].mxu0 %v529
        %v726 = vpop.f32.mrb[0].mxu0
        %v727 = vadd.f32 %v578, %v726
        %v728 = vpop.f32.mrb[0].mxu0
        %v729 = vpop.f32.mrb[0].mxu0
        %v730 = vadd.f32 %v578, %v729
        %v731 = vpop.f32.mrb[0].mxu0
        %732 = vmatprep.mubr.bf16.mxu0 %v532
        %733 = vmatmul.mubr.bf16.gmra.mrb[0].mxu0 %v531
        %v734 = vpop.f32.mrb[0].mxu0
        %v735 = vadd.f32 %v578, %v734
        %v736 = vpop.f32.mrb[0].mxu0
        %v737 = vpop.f32.mrb[0].mxu0
        %v738 = vadd.f32 %v578, %v737
        %v739 = vpop.f32.mrb[0].mxu0
        %740 = vmatprep.mubr.bf16.mxu0 %v534
        %741 = vmatmul.mubr.bf16.gmra.mrb[0].mxu0 %v533
        %v742 = vpop.f32.mrb[0].mxu0
        %v743 = vadd.f32 %v578, %v742
        %v744 = vpop.f32.mrb[0].mxu0
        %v745 = vpop.f32.mrb[0].mxu0
        %v746 = vadd.f32 %v578, %v745
        %v747 = vpop.f32.mrb[0].mxu0
        %748 = vmatprep.mubr.bf16.mxu0 %v536
        %749 = vmatmul.mubr.bf16.gmra.mrb[0].mxu0 %v535
        %v750 = vpop.f32.mrb[0].mxu0
        %v751 = vadd.f32 %v578, %v750
        %v752 = vpop.f32.mrb[0].mxu0
        %v753 = vpop.f32.mrb[0].mxu0
        %v754 = vadd.f32 %v578, %v753
        %v755 = vpop.f32.mrb[0].mxu0
        %756 = vmatprep.mubr.bf16.mxu0 %v538
        %757 = vmatmul.mubr.bf16.gmra.mrb[0].mxu0 %v537
        %v758 = vpop.f32.mrb[0].mxu0
        %v759 = vadd.f32 %v578, %v758
        %v760 = vpop.f32.mrb[0].mxu0
        %v761 = vpop.f32.mrb[0].mxu0
        %v762 = vadd.f32 %v578, %v761
        %v763 = vpop.f32.mrb[0].mxu0
        %764 = vmatprep.mubr.bf16.mxu0 %v540
        %765 = vmatmul.mubr.bf16.gmra.mrb[0].mxu0 %v539
        %v766 = vpop.f32.mrb[0].mxu0
        %v767 = vadd.f32 %v578, %v766
        %v768 = vpop.f32.mrb[0].mxu0
        %v769 = vpop.f32.mrb[0].mxu0
        %v770 = vadd.f32 %v578, %v769
        %v771 = vpop.f32.mrb[0].mxu0
        %772 = vdwg.mxu0
        %vm773 = vcmask 261120
        %774 = vst.msk [vmem:[%s245] sm:$0xff] %vm773, %v711
        %775 = vst.msk [vmem:[%s245 + $0x8] sm:$0xff] %vm773, %v714
        %776 = vst.msk [vmem:[%s245 + $0x10] sm:$0xff] %vm773, %v719
        %777 = vst.msk [vmem:[%s245 + $0x18] sm:$0xff] %vm773, %v722
        %778 = vst.msk [vmem:[%s245 + $0x20] sm:$0xff] %vm773, %v727
        %779 = vst.msk [vmem:[%s245 + $0x28] sm:$0xff] %vm773, %v730
        %780 = vst.msk [vmem:[%s245 + $0x30] sm:$0xff] %vm773, %v735
        %781 = vst.msk [vmem:[%s245 + $0x38] sm:$0xff] %vm773, %v738
        %782 = vst.msk [vmem:[%s245 + $0x40] sm:$0xff] %vm773, %v743
        %783 = vst.msk [vmem:[%s245 + $0x48] sm:$0xff] %vm773, %v746
        %784 = vst.msk [vmem:[%s245 + $0x50] sm:$0xff] %vm773, %v751
        %785 = vst.msk [vmem:[%s245 + $0x58] sm:$0xff] %vm773, %v754
        %786 = vst.msk [vmem:[%s245 + $0x60] sm:$0xff] %vm773, %v759
        %787 = vst.msk [vmem:[%s245 + $0x68] sm:$0xff] %vm773, %v762
        %788 = vst.msk [vmem:[%s245 + $0x70] sm:$0xff] %vm773, %v767
        %789 = vst.msk [vmem:[%s245 + $0x78] sm:$0xff] %vm773, %v770
        %s790 = smul.u32 16, %s19
        %p791 = scmp.lt.s32.totalorder %s790, 31
        %s792 = scalar_select %p791, %s790, 31
        %s793 = smul.addr %s792, 8
        %s794 = scalar_lea.vmem %s5, %s793
        // Predicated region
        $region45: #{tpu_custom_call.1} parent=39 // pred_check
          %p795 = pneg %p147
        $region46: #{tpu_custom_call.1} parent=39 // pred_check_branch
          %797 = sbr.rel (%p795) target = $region48
        $region47: #{tpu_custom_call.1} parent=39 // pred_region
          %s798 = smul.u32 16, %s19
        $region48: #{tpu_custom_call.1} parent=39 // pred_fallthru
          _
      $region40: #{tpu_custom_call.1} parent=5 // pred_fallthru
        _
      %p799 = scmp.le.s32.totalorder 2, %s14
      // Predicated region
      $region49: #{tpu_custom_call.1} parent=5 // pred_check
        %p800 = pneg %p799
      $region50: #{tpu_custom_call.1} parent=5 // pred_check_branch
        %802 = sbr.rel (%p800) target = $region52
      $region51: #{tpu_custom_call.1} parent=5 // pred_region
        %s803 = ssub.s32 %s14, 2
        // Predicated region
        $region53: #{tpu_custom_call.1} parent=51 // pred_check
          %p804 = pneg %p153
        $region54: #{tpu_custom_call.1} parent=51 // pred_check_branch
          %806 = sbr.rel (%p804) target = $region56
        $region55: #{tpu_custom_call.1} parent=51 // pred_region
          %s807 = smul.u32 16, %s20
          %p808 = scmp.lt.s32.totalorder %s807, 31
          %s809 = scalar_select %p808, %s807, 31
          %s810 = smul.addr %s809, 8
          %s811 = scalar_lea.vmem %s5, %s810
        $region56: #{tpu_custom_call.1} parent=51 // pred_fallthru
          _
      $region52: #{tpu_custom_call.1} parent=5 // pred_fallthru
        _
    $region6: #{tpu_custom_call.1} parent=1 // loop_footer
      %s18 = sadd.s32 1, %s14
    $region7: #{tpu_custom_call.1} parent=1 // loop_footer_branch
      %13 = sbr.rel target = $region3
    $region8: #{tpu_custom_call.1} parent=1 // loop_exit
      _
    %812 = vsyncpa [#allocation3], 1
    %s813 = scalar_lea.sflag [#allocation3], 1
    %814 = vsyncpa %s813, 1

</llo_original>
